<compile_context>
chip_gen: v6e
topology: v6e:2x2x1
jax: 0.10.0
libtpu: 0.0.40
codegen_flags: <defaults>
</compile_context>

<pallas_src>
import functools

import jax
import jax.numpy as jnp
from jax import lax
from jax.experimental import pallas as pl
from jax.experimental.pallas import tpu as pltpu

_LANE = 128      # lane width (last dim alignment)
_SUBLANE = 8     # sublane width (second-to-last dim alignment, f32)
_TM_MAX = 512    # batch-tile cap: 2*(512*128 + 512*128)*4B ~= 1 MiB << 32 MiB scoped VMEM


def _linear_kernel(x_ref, w_ref, b_ref, o_ref):
    # x: [TM, K_pad], w: [N_pad, K_pad], b: [1, N_pad]  -> o: [TM, N_pad]
    x = x_ref[...]
    w = w_ref[...]
    b = b_ref[...]
    # Contract over the feature dim of both operands directly (MXU-native);
    # accumulate in f32, add bias in f32, cast once on store.
    acc = lax.dot_general(
        x, w,
        dimension_numbers=(((1,), (1,)), ((), ())),
        preferred_element_type=jnp.float32,
    )
    o_ref[...] = (acc + b).astype(o_ref.dtype)


def _round_up(v, m):
    return ((v + m - 1) // m) * m


@functools.partial(jax.jit, static_argnames=("tm",))
def multiclass_regression_forward(x, weight, bias, *, tm=None):
    """x: [B, num_inputs], weight: [num_classes, num_inputs], bias: [num_classes]."""
    B, num_inputs = x.shape
    num_classes = weight.shape[0]

    # Pad contraction (K) and output-lane (N) dims to 128 multiples so both the
    # MXU pass and the output stores are fully lane-dense (zeros are free).
    k_pad = _round_up(max(num_inputs, _LANE), _LANE)
    n_pad = _round_up(max(num_classes, _LANE), _LANE)

    # Batch tile: multiple of 8 sublanes, capped for VMEM headroom (v7x: 64 MiB).
    if tm is None:
        tm = min(_TM_MAX, _round_up(B, _SUBLANE))
    b_pad = _round_up(B, tm)

    x_p = jnp.zeros((b_pad, k_pad), x.dtype).at[:B, :num_inputs].set(x)
    w_p = jnp.zeros((n_pad, k_pad), weight.dtype).at[:num_classes, :num_inputs].set(weight)
    b_p = jnp.zeros((1, n_pad), bias.dtype).at[0, :num_classes].set(bias)

    grid = (b_pad // tm,)

    cost = pl.CostEstimate(
        flops=2 * b_pad * k_pad * n_pad,
        transcendentals=0,
        bytes_accessed=4 * (b_pad * k_pad + n_pad * k_pad + n_pad + b_pad * n_pad),
    )

    out_p = pl.pallas_call(
        _linear_kernel,
        out_shape=jax.ShapeDtypeStruct((b_pad, n_pad), x.dtype),
        grid=grid,
        in_specs=[
            pl.BlockSpec((tm, k_pad), lambda i: (i, 0)),       # x: tiled over batch
            pl.BlockSpec((n_pad, k_pad), lambda i: (0, 0)),    # W: resident
            pl.BlockSpec((1, n_pad), lambda i: (0, 0)),        # b: resident
        ],
        out_specs=pl.BlockSpec((tm, n_pad), lambda i: (i, 0)),
        compiler_params=pltpu.CompilerParams(
            dimension_semantics=("parallel",)),                # shards batch across TCs (v7x)
        cost_estimate=cost,
    )(x_p, w_p, b_p)

    # Slice away the padding -> exact PyTorch forward semantics.
    return out_p[:B, :num_classes]


if __name__ == "__main__":
    # Small shapes consistent with the module: num_inputs=32 features, num_classes=10.
    batch, num_inputs, num_classes = 8, 32, 10

    key = jax.random.PRNGKey(0)
    kx, kw, kb = jax.random.split(key, 3)

    # Deterministic parameter init mimicking nn.Linear's uniform(-1/sqrt(fan_in), +1/sqrt(fan_in)).
    bound = 1.0 / jnp.sqrt(jnp.float32(num_inputs))
    weight = jax.random.uniform(kw, (num_classes, num_inputs), jnp.float32, -bound, bound)
    bias = jax.random.uniform(kb, (num_classes,), jnp.float32, -bound, bound)
    x = jax.random.normal(kx, (batch, num_inputs), jnp.float32)

    out = multiclass_regression_forward(x, weight, bias)
    out = jax.block_until_ready(out)

    # Correctness check against plain-JAX reference of the PyTorch forward.
    ref = x @ weight.T + bias
    assert out.shape == (batch, num_classes)
    assert jnp.allclose(out, ref, atol=1e-5, rtol=1e-5)

    print("KERNEL_OK")
</pallas_src>

<mosaic_0001>
module attributes {stable_mosaic.version = 11 : i64} {
  func.func @_linear_kernel(%arg0: i32, %arg1: memref<8x128xf32, #tpu.memory_space<vmem>>, %arg2: memref<128x128xf32, #tpu.memory_space<vmem>>, %arg3: memref<1x128xf32, #tpu.memory_space<vmem>>, %arg4: memref<8x128xf32, #tpu.memory_space<vmem>>) attributes {dimension_semantics = [#tpu.dimension_semantics<parallel>], iteration_bounds = array<i64: 1>, scalar_prefetch = 0 : i64, scratch_operands = 0 : i64, tpu.core_type = #tpu.core_type<tc>, window_params = [{transform_indices = @transform_0, window_bounds = array<i64: 8, 128>}, {pipeline_mode = #tpu.pipeline_mode<synchronous>, transform_indices = @transform_1, window_bounds = array<i64: 128, 128>}, {pipeline_mode = #tpu.pipeline_mode<synchronous>, transform_indices = @transform_2, window_bounds = array<i64: 1, 128>}, {transform_indices = @transform_3, window_bounds = array<i64: 8, 128>}]} {
    %c0 = arith.constant 0 : index
    %c0_0 = arith.constant 0 : index
    %0 = vector.load %arg1[%c0, %c0_0] : memref<8x128xf32, #tpu.memory_space<vmem>>, vector<8x128xf32>
    %c0_1 = arith.constant 0 : index
    %c0_2 = arith.constant 0 : index
    %1 = vector.load %arg2[%c0_1, %c0_2] : memref<128x128xf32, #tpu.memory_space<vmem>>, vector<128x128xf32>
    %c0_3 = arith.constant 0 : index
    %c0_4 = arith.constant 0 : index
    %2 = vector.load %arg3[%c0_3, %c0_4] : memref<1x128xf32, #tpu.memory_space<vmem>>, vector<1x128xf32>
    %cst = arith.constant dense<0.000000e+00> : vector<8x128xf32>
    %3 = tpu.matmul %0, %1, %cst {dimension_numbers = #tpu.dot_dimension_numbers<[1], [1], [0], [0], [0, 0, 1, 0], [], []>} : vector<8x128xf32>, vector<128x128xf32>, vector<8x128xf32> -> vector<8x128xf32>
    %4 = vector.broadcast %2 : vector<1x128xf32> to vector<8x128xf32>
    %5 = arith.addf %3, %4 : vector<8x128xf32>
    %c0_5 = arith.constant 0 : index
    %c0_6 = arith.constant 0 : index
    %6 = vector.load %arg4[%c0_5, %c0_6] : memref<8x128xf32, #tpu.memory_space<vmem>>, vector<8x128xf32>
    tpu.vector_store %arg4[%c0_5, %c0_6], %5 {strides = array<i32>} : memref<8x128xf32, #tpu.memory_space<vmem>>, vector<8x128xf32>,
    return
  }
  func.func @transform_0(%arg0: i32) -> (i32, i32) {
    %c0_i32 = arith.constant 0 : i32
    %c0_i32_0 = arith.constant 0 : i32
    return %arg0, %c0_i32 : i32, i32
  }
  func.func @transform_1(%arg0: i32) -> (i32, i32) {
    %c0_i32 = arith.constant 0 : i32
    %c0_i32_0 = arith.constant 0 : i32
    %c0_i32_1 = arith.constant 0 : i32
    return %c0_i32, %c0_i32_0 : i32, i32
  }
  func.func @transform_2(%arg0: i32) -> (i32, i32) {
    %c0_i32 = arith.constant 0 : i32
    %c0_i32_0 = arith.constant 0 : i32
    %c0_i32_1 = arith.constant 0 : i32
    return %c0_i32, %c0_i32_0 : i32, i32
  }
  func.func @transform_3(%arg0: i32) -> (i32, i32) {
    %c0_i32 = arith.constant 0 : i32
    %c0_i32_0 = arith.constant 0 : i32
    return %arg0, %c0_i32 : i32, i32
  }
}

</mosaic_0001>

<llo_original>
// kernel: multiclass_regression_forward.1
$region0: #{multiclass_regression_forward.1}
  #allocation0 [shape = 'u32[]', space=smem, size = 0x4, offset = 0x4, fixed_abs, tag = 'smem constant byte address 0x4 - core index']
  #allocation1 [shape = 'u32[144,128]{1,0:T(1,128)}', space=vmem, size = 0x12000, scoped, tag = 'internal scratch']
  %s0 = inlined_call_operand.vmem [shape: f32[8,128], index: 0, kind: input, shape index: {}]
  %s1 = inlined_call_operand.vmem [shape: f32[128,128], index: 1, kind: input, shape index: {}]
  %s2 = inlined_call_operand.vmem [shape: f32[1,128], index: 2, kind: input, shape index: {}]
  %s3 = inlined_call_operand.hbm [shape: f32[8,128], index: 3, kind: output, shape index: {}]
  %s4 = sld [smem:[#allocation0]]
  $region22: #{multiclass_regression_forward.1} parent=0
    _
  %s6 = ssub.s32 1, %s4
  %s7 = scalar_select 0, %s6, %s4
  $region1: #{multiclass_regression_forward.1} parent=0
    #allocation2 [shape = 'u8[4096]{0}', space=vmem, size = 0x1000, scoped, tag = 'output window, operand 0, single buffered']
    #allocation3 [shape = 's32[1]{0}', space=sflag, size = 0x4, scoped, tag = 'scoped memory for multiclass_regression_forward.1']
    %8 = vsyncpa [#allocation3], 0
    // Predicated region
    $region2: #{multiclass_regression_forward.1} parent=1 // pred_check
      _
    $region3: #{multiclass_regression_forward.1} parent=1 // pred_check_branch
      %10 = sbr.rel (0) target = $region5
    $region4: #{multiclass_regression_forward.1} parent=1 // pred_region
      _
    $region5: #{multiclass_regression_forward.1} parent=1 // pred_fallthru
      _
    // Predicated region
    $region6: #{multiclass_regression_forward.1} parent=1 // pred_check
      _
    $region7: #{multiclass_regression_forward.1} parent=1 // pred_check_branch
      %12 = sbr.rel (0) target = $region9
    $region8: #{multiclass_regression_forward.1} parent=1 // pred_region
      _
    $region9: #{multiclass_regression_forward.1} parent=1 // pred_fallthru
      _
    // Predicated region
    $region10: #{multiclass_regression_forward.1} parent=1 // pred_check
      _
    $region11: #{multiclass_regression_forward.1} parent=1 // pred_check_branch
      %14 = sbr.rel (0) target = $region13
    $region12: #{multiclass_regression_forward.1} parent=1 // pred_region
      _
    $region13: #{multiclass_regression_forward.1} parent=1 // pred_fallthru
      _
    %v15 = vld [vmem:[%s0] sm:$0xff]
    %v16 = vld [vmem:[%s1] sm:$0xff]
    %v17 = vld [vmem:[%s1 + $0x8] sm:$0xff]
    %v18 = vld [vmem:[%s1 + $0x10] sm:$0xff]
    %v19 = vld [vmem:[%s1 + $0x18] sm:$0xff]
    %v20 = vld [vmem:[%s1 + $0x20] sm:$0xff]
    %v21 = vld [vmem:[%s1 + $0x28] sm:$0xff]
    %v22 = vld [vmem:[%s1 + $0x30] sm:$0xff]
    %v23 = vld [vmem:[%s1 + $0x38] sm:$0xff]
    %v24 = vld [vmem:[%s1 + $0x40] sm:$0xff]
    %v25 = vld [vmem:[%s1 + $0x48] sm:$0xff]
    %v26 = vld [vmem:[%s1 + $0x50] sm:$0xff]
    %v27 = vld [vmem:[%s1 + $0x58] sm:$0xff]
    %v28 = vld [vmem:[%s1 + $0x60] sm:$0xff]
    %v29 = vld [vmem:[%s1 + $0x68] sm:$0xff]
    %v30 = vld [vmem:[%s1 + $0x70] sm:$0xff]
    %v31 = vld [vmem:[%s1 + $0x78] sm:$0xff]
    %v32 = vld [vmem:[%s2] sm:$0x1]
    %v34 = vlaneseq
    %v35 = vshrl.u32 %v34, 7
    %v36 = vsub.s32 0, %v35
    %v37 = vrot.slane %v32, %v36
    %39 = vmatprep.subr.mxu0 0.0
    %40 = vmatpush1.xpose.msra.mxu0 %v31
    %41 = vmatprep.subr.mxu0 0.0
    %42 = vmatpush1.xpose.msra.mxu0 %v30
    %43 = vmatprep.subr.mxu0 0.0
    %44 = vmatpush1.xpose.msra.mxu0 %v29
    %45 = vmatprep.subr.mxu0 0.0
    %46 = vmatpush1.xpose.msra.mxu0 %v28
    %47 = vmatprep.subr.mxu0 0.0
    %48 = vmatpush1.xpose.msra.mxu0 %v27
    %49 = vmatprep.subr.mxu0 0.0
    %50 = vmatpush1.xpose.msra.mxu0 %v26
    %51 = vmatprep.subr.mxu0 0.0
    %52 = vmatpush1.xpose.msra.mxu0 %v25
    %53 = vmatprep.subr.mxu0 0.0
    %54 = vmatpush1.xpose.msra.mxu0 %v24
    %55 = vmatprep.subr.mxu0 0.0
    %56 = vmatpush1.xpose.msra.mxu0 %v23
    %57 = vmatprep.subr.mxu0 0.0
    %58 = vmatpush1.xpose.msra.mxu0 %v22
    %59 = vmatprep.subr.mxu0 0.0
    %60 = vmatpush1.xpose.msra.mxu0 %v21
    %61 = vmatprep.subr.mxu0 0.0
    %62 = vmatpush1.xpose.msra.mxu0 %v20
    %63 = vmatprep.subr.mxu0 0.0
    %64 = vmatpush1.xpose.msra.mxu0 %v19
    %65 = vmatprep.subr.mxu0 0.0
    %66 = vmatpush1.xpose.msra.mxu0 %v18
    %67 = vmatprep.subr.mxu0 0.0
    %68 = vmatpush1.xpose.msra.mxu0 %v17
    %69 = vmatprep.subr.mxu0 0.0
    %70 = vmatpush1.xpose.msra.mxu0 %v16
    %71 = vmatprep.subr.mxu0 0.0
    %72 = vmatpush2.xpose.msra.mxu0 0.0
    %73 = vmatprep.subr.mxu0 0.0
    %74 = vmatpush2.xpose.msra.mxu0 0.0
    %75 = vmatprep.subr.mxu0 0.0
    %76 = vmatpush2.xpose.msra.mxu0 0.0
    %77 = vmatprep.subr.mxu0 0.0
    %78 = vmatpush2.xpose.msra.mxu0 0.0
    %79 = vmatprep.subr.mxu0 0.0
    %80 = vmatpush2.xpose.msra.mxu0 0.0
    %81 = vmatprep.subr.mxu0 0.0
    %82 = vmatpush2.xpose.msra.mxu0 0.0
    %83 = vmatprep.subr.mxu0 0.0
    %84 = vmatpush2.xpose.msra.mxu0 0.0
    %85 = vmatprep.subr.mxu0 0.0
    %86 = vmatpush2.xpose.msra.mxu0 0.0
    %87 = vmatprep.subr.mxu0 0.0
    %88 = vmatpush2.xpose.msra.mxu0 0.0
    %89 = vmatprep.subr.mxu0 0.0
    %90 = vmatpush2.xpose.msra.mxu0 0.0
    %91 = vmatprep.subr.mxu0 0.0
    %92 = vmatpush2.xpose.msra.mxu0 0.0
    %93 = vmatprep.subr.mxu0 0.0
    %94 = vmatpush2.xpose.msra.mxu0 0.0
    %95 = vmatprep.subr.mxu0 0.0
    %96 = vmatpush2.xpose.msra.mxu0 0.0
    %97 = vmatprep.subr.mxu0 0.0
    %98 = vmatpush2.xpose.msra.mxu0 0.0
    %99 = vmatprep.subr.mxu0 0.0
    %100 = vmatpush2.xpose.msra.mxu0 0.0
    %101 = vmatprep.subr.mxu0 0.0
    %102 = vmatpush2.xpose.msra.mxu0 0.0
    %103 = vmatprep.mubr.f32.mxu0 0.0
    %104 = vmatmul.mubr.f32.gmra.mxu0 %v15
    %v105 = vpop.f32.mrf.mxu0
    %v106 = vadd.f32 %v37, %v105
    %v107 = vpop.f32.mrf.mxu0
    %108 = vdwg.mxu0
    %109 = vst [vmem:[#allocation2] sm:$0xff] %v106
    // Predicated region
    $region14: #{multiclass_regression_forward.1} parent=1 // pred_check
      _
    $region15: #{multiclass_regression_forward.1} parent=1 // pred_check_branch
      %111 = sbr.rel (0) target = $region17
    $region16: #{multiclass_regression_forward.1} parent=1 // pred_region
      %s113 = ssub.s32 128, 128
      %114 = vsyncadd [#allocation3], %s113
      %s116 = sshll.u32 [#allocation2], 4
      %s117 = int_to_ptr.vmem [resolvable:$true] %s116
      %119 = dma.vmem_to_hbm [thread:$0]  %s117, 128, %s3, [#allocation3]
    $region17: #{multiclass_regression_forward.1} parent=1 // pred_fallthru
      _
    // Predicated region
    $region18: #{multiclass_regression_forward.1} parent=1 // pred_check
      _
    $region19: #{multiclass_regression_forward.1} parent=1 // pred_check_branch
      %121 = sbr.rel (0) target = $region21
    $region20: #{multiclass_regression_forward.1} parent=1 // pred_region
      %122 = dma.done [#allocation3], 128
    $region21: #{multiclass_regression_forward.1} parent=1 // pred_fallthru
      _
    %123 = vsyncpa [#allocation3], 1

</llo_original>
